<compile_context>
chip_gen: v7x
topology: tpu7x:2x2x1
jax: 0.10.0
libtpu: 0.0.40
codegen_flags: <defaults>
</compile_context>

<pallas_src>
import jax
import jax.numpy as jnp
from jax.experimental import pallas as pl
from jax.experimental.pallas import tpu as pltpu

_OUT_LANES = 128   # lane-dense padded width for the final (D, 8) layer
_OUT_COLS = 8      # true output width of the last Linear


def _wp_refine_kernel(x_ref, w1_ref, b1_ref, w2_ref, b2_ref, w3_ref, b3_ref, o_ref):
    # x_ref: (tm, D) bf16 ; w1/w2: (D, D) bf16 ; w3: (D, 128) bf16 (zero-padded cols)
    # b1/b2: (1, D) f32  ; b3: (1, 128) f32    ; o_ref: (tm, 128) f32 (lane-dense)
    x = x_ref[...]

    h = jnp.dot(x, w1_ref[...], preferred_element_type=jnp.float32)
    h = jnp.maximum(h + b1_ref[...], 0.0)            # f32 bias + ReLU on the VPU
    h = h.astype(jnp.bfloat16)

    h = jnp.dot(h, w2_ref[...], preferred_element_type=jnp.float32)
    h = jnp.maximum(h + b2_ref[...], 0.0)
    h = h.astype(jnp.bfloat16)

    y = jnp.dot(h, w3_ref[...], preferred_element_type=jnp.float32) + b3_ref[...]
    o_ref[...] = y                                    # full-width (tm, 128) store


def _auto_tile(bs):
    # multiple of 16 (bf16 sublane packing) and of 128 when large enough (v5e MXU M);
    # cap at 256 so realistic batches keep >= 2 grid steps for v7x's 2 TensorCores.
    return min(256, 16 * pl.cdiv(bs, 16))


def wp_refine(cls_emb, params, *, tm=None):
    """Pallas implementation of Wp_refine.forward.

    cls_emb: (bs, embed_dims) float32 (or bf16)
    params : dict with w1 (D,D), b1 (1,D), w2 (D,D), b2 (1,D), w3 (D,8), b3 (1,8)
             (weights stored transposed vs. PyTorch -> y = x @ W + b)
    returns: (bs, 4, 2) float32
    """
    bs, d = cls_emb.shape
    if tm is None:
        tm = _auto_tile(bs)

    # Pad batch to a multiple of the tile (handles ragged batches).
    bs_pad = tm * pl.cdiv(bs, tm)
    x = cls_emb.astype(jnp.bfloat16)
    if bs_pad != bs:
        x = jnp.pad(x, ((0, bs_pad - bs), (0, 0)))

    w1 = params["w1"].astype(jnp.bfloat16)
    w2 = params["w2"].astype(jnp.bfloat16)
    b1 = params["b1"].astype(jnp.float32)
    b2 = params["b2"].astype(jnp.float32)
    # Zero-pad the final layer to 128 output lanes (lane-dense stores; MXU cost unchanged).
    w3 = jnp.pad(params["w3"].astype(jnp.bfloat16), ((0, 0), (0, _OUT_LANES - _OUT_COLS)))
    b3 = jnp.pad(params["b3"].astype(jnp.float32), ((0, 0), (0, _OUT_LANES - _OUT_COLS)))

    grid = (bs_pad // tm,)

    flops = 2 * bs_pad * d * (d + d + _OUT_LANES)
    bytes_accessed = (
        x.size * 2                                   # bf16 activations in
        + (w1.size + w2.size + w3.size) * 2          # bf16 weights
        + (b1.size + b2.size + b3.size) * 4          # f32 biases
        + bs_pad * _OUT_LANES * 4                    # f32 output slab
    )

    out = pl.pallas_call(
        _wp_refine_kernel,
        out_shape=jax.ShapeDtypeStruct((bs_pad, _OUT_LANES), jnp.float32),
        grid_spec=pltpu.PrefetchScalarGridSpec(
            num_scalar_prefetch=0,
            grid=grid,
            in_specs=[
                pl.BlockSpec((tm, d), lambda i: (i, 0)),           # x tile over batch
                pl.BlockSpec((d, d), lambda i: (0, 0)),            # w1 (replicated)
                pl.BlockSpec((1, d), lambda i: (0, 0)),            # b1
                pl.BlockSpec((d, d), lambda i: (0, 0)),            # w2
                pl.BlockSpec((1, d), lambda i: (0, 0)),            # b2
                pl.BlockSpec((d, _OUT_LANES), lambda i: (0, 0)),   # w3 (padded)
                pl.BlockSpec((1, _OUT_LANES), lambda i: (0, 0)),   # b3 (padded)
            ],
            out_specs=pl.BlockSpec((tm, _OUT_LANES), lambda i: (i, 0)),
        ),
        compiler_params=pltpu.CompilerParams(
            dimension_semantics=("parallel",),
            vmem_limit_bytes=48 * 1024 * 1024,
        ),
        cost_estimate=pl.CostEstimate(
            flops=flops, transcendentals=0, bytes_accessed=bytes_accessed
        ),
    )(x, w1, b1, w2, b2, w3, b3)

    # Wrapper-side layout glue: drop the zero-padded lanes / rows, reshape to (bs, 4, 2).
    return out[:bs, :_OUT_COLS].reshape(bs, 4, 2)


def init_params(key, embed_dims):
    """Deterministic synthetic parameters matching Wp_refine.__init__ shapes
    (num_reg_fcs=2 hidden Linear+ReLU layers, then Linear(embed_dims, 8)).
    Weights stored bf16 (MXU-native), biases f32."""
    ks = jax.random.split(key, 6)
    scale = 0.02
    return {
        "w1": (scale * jax.random.normal(ks[0], (embed_dims, embed_dims), jnp.float32)).astype(jnp.bfloat16),
        "b1": scale * jax.random.normal(ks[1], (1, embed_dims), jnp.float32),
        "w2": (scale * jax.random.normal(ks[2], (embed_dims, embed_dims), jnp.float32)).astype(jnp.bfloat16),
        "b2": scale * jax.random.normal(ks[3], (1, embed_dims), jnp.float32),
        "w3": (scale * jax.random.normal(ks[4], (embed_dims, 8), jnp.float32)).astype(jnp.bfloat16),
        "b3": scale * jax.random.normal(ks[5], (1, 8), jnp.float32),
    }


def wp_refine_ref(cls_emb, params):
    """Pure-JAX reference that emulates the kernel's bf16-in / f32-accumulate numerics."""
    def bf16(a):
        return a.astype(jnp.bfloat16).astype(jnp.float32)

    h = jnp.maximum(bf16(cls_emb) @ bf16(params["w1"]) + params["b1"], 0.0)
    h = jnp.maximum(bf16(h) @ bf16(params["w2"]) + params["b2"], 0.0)
    y = bf16(h) @ bf16(params["w3"]) + params["b3"]
    return y.reshape(cls_emb.shape[0], 4, 2)


if __name__ == "__main__":
    key = jax.random.PRNGKey(0)
    k_x, k_p = jax.random.split(key)

    bs = 512          # batch: 2 grid steps at tm=256 (lets v7x use both TensorCores)
    embed_dims = 128  # lane-aligned embedding dim

    cls_emb = jax.random.normal(k_x, (bs, embed_dims), jnp.float32)
    params = init_params(k_p, embed_dims)

    out = wp_refine(cls_emb, params)
    out = jax.block_until_ready(out)

    ref = wp_refine_ref(cls_emb, params)
    assert out.shape == (bs, 4, 2), out.shape
    assert jnp.allclose(out, ref, atol=1e-3, rtol=1e-3), "mismatch vs reference"

    print("KERNEL_OK")
</pallas_src>

<mosaic_0001>
module attributes {stable_mosaic.version = 11 : i64} {
  func.func @_wp_refine_kernel(%arg0: i32, %arg1: memref<256x128xbf16, #tpu.memory_space<vmem>>, %arg2: memref<128x128xbf16, #tpu.memory_space<vmem>>, %arg3: memref<1x128xf32, #tpu.memory_space<vmem>>, %arg4: memref<128x128xbf16, #tpu.memory_space<vmem>>, %arg5: memref<1x128xf32, #tpu.memory_space<vmem>>, %arg6: memref<128x128xbf16, #tpu.memory_space<vmem>>, %arg7: memref<1x128xf32, #tpu.memory_space<vmem>>, %arg8: memref<256x128xf32, #tpu.memory_space<vmem>>) attributes {dimension_semantics = [#tpu.dimension_semantics<parallel>], iteration_bounds = array<i64: 2>, scalar_prefetch = 0 : i64, scratch_operands = 0 : i64, tpu.core_type = #tpu.core_type<tc>, window_params = [{transform_indices = @transform_0, window_bounds = array<i64: 256, 128>}, {pipeline_mode = #tpu.pipeline_mode<synchronous>, transform_indices = @transform_1, window_bounds = array<i64: 128, 128>}, {pipeline_mode = #tpu.pipeline_mode<synchronous>, transform_indices = @transform_2, window_bounds = array<i64: 1, 128>}, {pipeline_mode = #tpu.pipeline_mode<synchronous>, transform_indices = @transform_3, window_bounds = array<i64: 128, 128>}, {pipeline_mode = #tpu.pipeline_mode<synchronous>, transform_indices = @transform_4, window_bounds = array<i64: 1, 128>}, {pipeline_mode = #tpu.pipeline_mode<synchronous>, transform_indices = @transform_5, window_bounds = array<i64: 128, 128>}, {pipeline_mode = #tpu.pipeline_mode<synchronous>, transform_indices = @transform_6, window_bounds = array<i64: 1, 128>}, {transform_indices = @transform_7, window_bounds = array<i64: 256, 128>}]} {
    %c0 = arith.constant 0 : index
    %c0_0 = arith.constant 0 : index
    %0 = vector.load %arg1[%c0, %c0_0] : memref<256x128xbf16, #tpu.memory_space<vmem>>, vector<256x128xbf16>
    %c0_1 = arith.constant 0 : index
    %c0_2 = arith.constant 0 : index
    %1 = vector.load %arg2[%c0_1, %c0_2] : memref<128x128xbf16, #tpu.memory_space<vmem>>, vector<128x128xbf16>
    %cst = arith.constant dense<0.000000e+00> : vector<256x128xf32>
    %2 = tpu.matmul %0, %1, %cst {dimension_numbers = #tpu.dot_dimension_numbers<[1], [0], [0], [1], [0, 0, 1, 1], [], []>} : vector<256x128xbf16>, vector<128x128xbf16>, vector<256x128xf32> -> vector<256x128xf32>
    %c0_3 = arith.constant 0 : index
    %c0_4 = arith.constant 0 : index
    %3 = vector.load %arg3[%c0_3, %c0_4] : memref<1x128xf32, #tpu.memory_space<vmem>>, vector<1x128xf32>
    %4 = vector.broadcast %3 : vector<1x128xf32> to vector<256x128xf32>
    %5 = arith.addf %2, %4 : vector<256x128xf32>
    %cst_5 = arith.constant 0.000000e+00 : f32
    %6 = vector.broadcast %cst_5 : f32 to vector<256x128xf32>
    %7 = arith.maximumf %5, %6 : vector<256x128xf32>
    %8 = arith.truncf %7 : vector<256x128xf32> to vector<256x128xbf16>
    %c0_6 = arith.constant 0 : index
    %c0_7 = arith.constant 0 : index
    %9 = vector.load %arg4[%c0_6, %c0_7] : memref<128x128xbf16, #tpu.memory_space<vmem>>, vector<128x128xbf16>
    %cst_8 = arith.constant dense<0.000000e+00> : vector<256x128xf32>
    %10 = tpu.matmul %8, %9, %cst_8 {dimension_numbers = #tpu.dot_dimension_numbers<[1], [0], [0], [1], [0, 0, 1, 1], [], []>} : vector<256x128xbf16>, vector<128x128xbf16>, vector<256x128xf32> -> vector<256x128xf32>
    %c0_9 = arith.constant 0 : index
    %c0_10 = arith.constant 0 : index
    %11 = vector.load %arg5[%c0_9, %c0_10] : memref<1x128xf32, #tpu.memory_space<vmem>>, vector<1x128xf32>
    %12 = vector.broadcast %11 : vector<1x128xf32> to vector<256x128xf32>
    %13 = arith.addf %10, %12 : vector<256x128xf32>
    %cst_11 = arith.constant 0.000000e+00 : f32
    %14 = vector.broadcast %cst_11 : f32 to vector<256x128xf32>
    %15 = arith.maximumf %13, %14 : vector<256x128xf32>
    %16 = arith.truncf %15 : vector<256x128xf32> to vector<256x128xbf16>
    %c0_12 = arith.constant 0 : index
    %c0_13 = arith.constant 0 : index
    %17 = vector.load %arg6[%c0_12, %c0_13] : memref<128x128xbf16, #tpu.memory_space<vmem>>, vector<128x128xbf16>
    %cst_14 = arith.constant dense<0.000000e+00> : vector<256x128xf32>
    %18 = tpu.matmul %16, %17, %cst_14 {dimension_numbers = #tpu.dot_dimension_numbers<[1], [0], [0], [1], [0, 0, 1, 1], [], []>} : vector<256x128xbf16>, vector<128x128xbf16>, vector<256x128xf32> -> vector<256x128xf32>
    %c0_15 = arith.constant 0 : index
    %c0_16 = arith.constant 0 : index
    %19 = vector.load %arg7[%c0_15, %c0_16] : memref<1x128xf32, #tpu.memory_space<vmem>>, vector<1x128xf32>
    %20 = vector.broadcast %19 : vector<1x128xf32> to vector<256x128xf32>
    %21 = arith.addf %18, %20 : vector<256x128xf32>
    %c0_17 = arith.constant 0 : index
    %c0_18 = arith.constant 0 : index
    %22 = vector.load %arg8[%c0_17, %c0_18] : memref<256x128xf32, #tpu.memory_space<vmem>>, vector<256x128xf32>
    tpu.vector_store %arg8[%c0_17, %c0_18], %21 {strides = array<i32>} : memref<256x128xf32, #tpu.memory_space<vmem>>, vector<256x128xf32>,
    return
  }
  func.func @transform_0(%arg0: i32) -> (i32, i32) {
    %c0_i32 = arith.constant 0 : i32
    %c0_i32_0 = arith.constant 0 : i32
    return %arg0, %c0_i32 : i32, i32
  }
  func.func @transform_1(%arg0: i32) -> (i32, i32) {
    %c0_i32 = arith.constant 0 : i32
    %c0_i32_0 = arith.constant 0 : i32
    %c0_i32_1 = arith.constant 0 : i32
    return %c0_i32, %c0_i32_0 : i32, i32
  }
  func.func @transform_2(%arg0: i32) -> (i32, i32) {
    %c0_i32 = arith.constant 0 : i32
    %c0_i32_0 = arith.constant 0 : i32
    %c0_i32_1 = arith.constant 0 : i32
    return %c0_i32, %c0_i32_0 : i32, i32
  }
  func.func @transform_3(%arg0: i32) -> (i32, i32) {
    %c0_i32 = arith.constant 0 : i32
    %c0_i32_0 = arith.constant 0 : i32
    %c0_i32_1 = arith.constant 0 : i32
    return %c0_i32, %c0_i32_0 : i32, i32
  }
  func.func @transform_4(%arg0: i32) -> (i32, i32) {
    %c0_i32 = arith.constant 0 : i32
    %c0_i32_0 = arith.constant 0 : i32
    %c0_i32_1 = arith.constant 0 : i32
    return %c0_i32, %c0_i32_0 : i32, i32
  }
  func.func @transform_5(%arg0: i32) -> (i32, i32) {
    %c0_i32 = arith.constant 0 : i32
    %c0_i32_0 = arith.constant 0 : i32
    %c0_i32_1 = arith.constant 0 : i32
    return %c0_i32, %c0_i32_0 : i32, i32
  }
  func.func @transform_6(%arg0: i32) -> (i32, i32) {
    %c0_i32 = arith.constant 0 : i32
    %c0_i32_0 = arith.constant 0 : i32
    %c0_i32_1 = arith.constant 0 : i32
    return %c0_i32, %c0_i32_0 : i32, i32
  }
  func.func @transform_7(%arg0: i32) -> (i32, i32) {
    %c0_i32 = arith.constant 0 : i32
    %c0_i32_0 = arith.constant 0 : i32
    return %arg0, %c0_i32 : i32, i32
  }
}

</mosaic_0001>

<llo_original>
// kernel: tpu_custom_call.1
$region0: #{tpu_custom_call.1}
  #allocation0 [shape = 'u32[]', space=smem, size = 0x4, offset = 0x4, fixed_abs, tag = 'smem constant byte address 0x4 - core index']
  #allocation1 [shape = 'u32[144,128]{1,0:T(1,128)}', space=vmem, size = 0x12000, scoped, tag = 'internal scratch']
  %s0 = inlined_call_operand.hbm [shape: bf16[512,128], index: 0, kind: input, shape index: {}]
  %s1 = inlined_call_operand.hbm [shape: bf16[128,128], index: 1, kind: input, shape index: {}]
  %s2 = inlined_call_operand.vmem [shape: f32[1,128], index: 2, kind: input, shape index: {}]
  %s3 = inlined_call_operand.hbm [shape: bf16[128,128], index: 3, kind: input, shape index: {}]
  %s4 = inlined_call_operand.vmem [shape: f32[1,128], index: 4, kind: input, shape index: {}]
  %s5 = inlined_call_operand.hbm [shape: bf16[128,128], index: 5, kind: input, shape index: {}]
  %s6 = inlined_call_operand.vmem [shape: f32[1,128], index: 6, kind: input, shape index: {}]
  %s7 = inlined_call_operand.hbm [shape: f32[512,128], index: 7, kind: output, shape index: {}]
  %s8 = sld [smem:[#allocation0]]
  $region77: #{tpu_custom_call.1} parent=0
    _
  %s10 = ssub.s32 1, %s8
  %s11 = scalar_select 0, %s10, %s8
  $region1: #{tpu_custom_call.1} parent=0
    #allocation2 [shape = 'u8[131072]{0}', space=vmem, size = 0x20000, scoped, tag = 'input window, operand 0']
    #allocation3 [shape = 's32[2]{0}', space=sflag, size = 0x8, scoped, tag = 'scoped memory for tpu_custom_call.1']
    #allocation4 [shape = 's32[2]{0}', space=sflag, size = 0x8, scoped, tag = 'scoped memory for tpu_custom_call.1']
    #allocation5 [shape = 'u8[32768]{0}', space=vmem, size = 0x8000, scoped, tag = 'input window, operand 1, single buffered']
    #allocation6 [shape = 's32[1]{0}', space=sflag, size = 0x4, scoped, tag = 'scoped memory for tpu_custom_call.1']
    #allocation7 [shape = 'u8[32768]{0}', space=vmem, size = 0x8000, scoped, tag = 'input window, operand 3, single buffered']
    #allocation8 [shape = 'u8[32768]{0}', space=vmem, size = 0x8000, scoped, tag = 'input window, operand 5, single buffered']
    #allocation9 [shape = 's32[1]{0}', space=sflag, size = 0x4, scoped, tag = 'scoped memory for tpu_custom_call.1']
    #allocation10 [shape = 'u8[262144]{0}', space=vmem, size = 0x40000, scoped, tag = 'output window, operand 0']
    %12 = vsyncpa [#allocation3], 0
    %s13 = scalar_lea.sflag [#allocation3], 1
    %14 = vsyncpa %s13, 0
    %15 = vsyncpa [#allocation6], 0
    %16 = vsyncpa [#allocation9], 0
    %17 = vsyncpa [#allocation4], 0
    %s18 = scalar_lea.sflag [#allocation4], 1
    %19 = vsyncpa %s18, 0
    loop: start=0, step=1, limit=4
    $region2: #{tpu_custom_call.1} parent=1 // loop_pre_header
      _
    $region3: #{tpu_custom_call.1} parent=1 // loop_header
      %s21 = sphi 0, %s25
      %p22 = scmp.ge.s32.totalorder %s21, 4
      %s31 = sphi 0, %s33
      %s34 = sphi 0, %s31
      %s35 = sphi 0, %s34
      %s51 = sphi 0, %s35
      %s55 = sphi 0, %s55
      %s57 = sphi 0, %s55
      %s58 = sphi 0, %s57
      %s72 = sphi 0, %s58
      %s76 = sphi 0, %s76
      %s78 = sphi 0, %s76
      %s79 = sphi 0, %s78
      %s93 = sphi 0, %s79
      %s97 = sphi 0, %s97
      %s99 = sphi 0, %s97
      %s100 = sphi 0, %s99
      %s114 = sphi 0, %s100
      %s118 = sphi 0, %s118
      %s120 = sphi 0, %s118
      %s121 = sphi 0, %s120
      %s135 = sphi 0, %s121
      %s139 = sphi 0, %s139
      %s141 = sphi 0, %s139
      %s142 = sphi 0, %s141
      %s156 = sphi 0, %s142
      %s160 = sphi 0, %s160
      %s162 = sphi 0, %s160
      %s163 = sphi 0, %s162
      %s177 = sphi 0, %s163
      %s183 = sphi 0, %s185
      %s186 = sphi 0, %s183
      %s187 = sphi 0, %s186
      %s203 = sphi 0, %s187
    $region4: #{tpu_custom_call.1} parent=1 // loop_header_branch
      %24 = sbr.rel (%p22) target = $region8
    $region5: #{tpu_custom_call.1} parent=1 // loop_body
      %s26 = ssub.s32 %s21, 1
      %s27 = ssub.s32 %s21, 2
      %s28 = sadd.s32 %s21, 1
      %s29 = ssub.s32 %s21, %s28
      %p30 = scmp.eq.s32.totalorder %s29, 0
      %s32 = sadd.s32 %s31, 1
      %s33 = scalar_select %p30, %s31, %s32
      %p36 = pneg %p30
      %p37 = scmp.eq.s32.totalorder %s21, 1
      %p38 = por %p36, %p37
      %p39 = scmp.ne.s32.totalorder %s31, %s34
      %p40 = scmp.eq.s32.totalorder %s21, 0
      %p41 = por %p39, %p40
      %p42 = scmp.ne.s32.totalorder %s31, %s34
      %p43 = scmp.eq.s32.totalorder %s26, 1
      %p44 = por %p42, %p43
      %p45 = scmp.ne.s32.totalorder %s34, %s35
      %p46 = scmp.eq.s32.totalorder %s26, 0
      %p47 = por %p45, %p46
      %p48 = scmp.ne.s32.totalorder %s34, %s35
      %p49 = scmp.eq.s32.totalorder %s27, 1
      %p50 = por %p48, %p49
      %p52 = scmp.ne.s32.totalorder %s35, %s51
      %p53 = scmp.eq.s32.totalorder %s27, 0
      %p54 = por %p52, %p53
      %s56 = sadd.s32 %s55, 1
      %p59 = scmp.eq.s32.totalorder %s21, 1
      %p60 = scmp.ne.s32.totalorder %s55, %s57
      %p61 = scmp.eq.s32.totalorder %s21, 0
      %p62 = por %p60, %p61
      %p63 = scmp.ne.s32.totalorder %s55, %s57
      %p64 = scmp.eq.s32.totalorder %s26, 1
      %p65 = por %p63, %p64
      %p66 = scmp.ne.s32.totalorder %s57, %s58
      %p67 = scmp.eq.s32.totalorder %s26, 0
      %p68 = por %p66, %p67
      %p69 = scmp.ne.s32.totalorder %s57, %s58
      %p70 = scmp.eq.s32.totalorder %s27, 1
      %p71 = por %p69, %p70
      %p73 = scmp.ne.s32.totalorder %s58, %s72
      %p74 = scmp.eq.s32.totalorder %s27, 0
      %p75 = por %p73, %p74
      %s77 = sadd.s32 %s76, 1
      %p80 = scmp.eq.s32.totalorder %s21, 1
      %p81 = scmp.ne.s32.totalorder %s76, %s78
      %p82 = scmp.eq.s32.totalorder %s21, 0
      %p83 = por %p81, %p82
      %p84 = scmp.ne.s32.totalorder %s76, %s78
      %p85 = scmp.eq.s32.totalorder %s26, 1
      %p86 = por %p84, %p85
      %p87 = scmp.ne.s32.totalorder %s78, %s79
      %p88 = scmp.eq.s32.totalorder %s26, 0
      %p89 = por %p87, %p88
      %p90 = scmp.ne.s32.totalorder %s78, %s79
      %p91 = scmp.eq.s32.totalorder %s27, 1
      %p92 = por %p90, %p91
      %p94 = scmp.ne.s32.totalorder %s79, %s93
      %p95 = scmp.eq.s32.totalorder %s27, 0
      %p96 = por %p94, %p95
      %s98 = sadd.s32 %s97, 1
      %p101 = scmp.eq.s32.totalorder %s21, 1
      %p102 = scmp.ne.s32.totalorder %s97, %s99
      %p103 = scmp.eq.s32.totalorder %s21, 0
      %p104 = por %p102, %p103
      %p105 = scmp.ne.s32.totalorder %s97, %s99
      %p106 = scmp.eq.s32.totalorder %s26, 1
      %p107 = por %p105, %p106
      %p108 = scmp.ne.s32.totalorder %s99, %s100
      %p109 = scmp.eq.s32.totalorder %s26, 0
      %p110 = por %p108, %p109
      %p111 = scmp.ne.s32.totalorder %s99, %s100
      %p112 = scmp.eq.s32.totalorder %s27, 1
      %p113 = por %p111, %p112
      %p115 = scmp.ne.s32.totalorder %s100, %s114
      %p116 = scmp.eq.s32.totalorder %s27, 0
      %p117 = por %p115, %p116
      %s119 = sadd.s32 %s118, 1
      %p122 = scmp.eq.s32.totalorder %s21, 1
      %p123 = scmp.ne.s32.totalorder %s118, %s120
      %p124 = scmp.eq.s32.totalorder %s21, 0
      %p125 = por %p123, %p124
      %p126 = scmp.ne.s32.totalorder %s118, %s120
      %p127 = scmp.eq.s32.totalorder %s26, 1
      %p128 = por %p126, %p127
      %p129 = scmp.ne.s32.totalorder %s120, %s121
      %p130 = scmp.eq.s32.totalorder %s26, 0
      %p131 = por %p129, %p130
      %p132 = scmp.ne.s32.totalorder %s120, %s121
      %p133 = scmp.eq.s32.totalorder %s27, 1
      %p134 = por %p132, %p133
      %p136 = scmp.ne.s32.totalorder %s121, %s135
      %p137 = scmp.eq.s32.totalorder %s27, 0
      %p138 = por %p136, %p137
      %s140 = sadd.s32 %s139, 1
      %p143 = scmp.eq.s32.totalorder %s21, 1
      %p144 = scmp.ne.s32.totalorder %s139, %s141
      %p145 = scmp.eq.s32.totalorder %s21, 0
      %p146 = por %p144, %p145
      %p147 = scmp.ne.s32.totalorder %s139, %s141
      %p148 = scmp.eq.s32.totalorder %s26, 1
      %p149 = por %p147, %p148
      %p150 = scmp.ne.s32.totalorder %s141, %s142
      %p151 = scmp.eq.s32.totalorder %s26, 0
      %p152 = por %p150, %p151
      %p153 = scmp.ne.s32.totalorder %s141, %s142
      %p154 = scmp.eq.s32.totalorder %s27, 1
      %p155 = por %p153, %p154
      %p157 = scmp.ne.s32.totalorder %s142, %s156
      %p158 = scmp.eq.s32.totalorder %s27, 0
      %p159 = por %p157, %p158
      %s161 = sadd.s32 %s160, 1
      %p164 = scmp.eq.s32.totalorder %s21, 1
      %p165 = scmp.ne.s32.totalorder %s160, %s162
      %p166 = scmp.eq.s32.totalorder %s21, 0
      %p167 = por %p165, %p166
      %p168 = scmp.ne.s32.totalorder %s160, %s162
      %p169 = scmp.eq.s32.totalorder %s26, 1
      %p170 = por %p168, %p169
      %p171 = scmp.ne.s32.totalorder %s162, %s163
      %p172 = scmp.eq.s32.totalorder %s26, 0
      %p173 = por %p171, %p172
      %p174 = scmp.ne.s32.totalorder %s162, %s163
      %p175 = scmp.eq.s32.totalorder %s27, 1
      %p176 = por %p174, %p175
      %p178 = scmp.ne.s32.totalorder %s163, %s177
      %p179 = scmp.eq.s32.totalorder %s27, 0
      %p180 = por %p178, %p179
      %s181 = ssub.s32 %s21, %s28
      %p182 = scmp.eq.s32.totalorder %s181, 0
      %s184 = sadd.s32 %s183, 1
      %s185 = scalar_select %p182, %s183, %s184
      %p188 = pneg %p182
      %p189 = scmp.eq.s32.totalorder %s21, 1
      %p190 = por %p188, %p189
      %p191 = scmp.ne.s32.totalorder %s183, %s186
      %p192 = scmp.eq.s32.totalorder %s21, 0
      %p193 = por %p191, %p192
      %p194 = scmp.ne.s32.totalorder %s183, %s186
      %p195 = scmp.eq.s32.totalorder %s26, 1
      %p196 = por %p194, %p195
      %p197 = scmp.ne.s32.totalorder %s186, %s187
      %p198 = scmp.eq.s32.totalorder %s26, 0
      %p199 = por %p197, %p198
      %p200 = scmp.ne.s32.totalorder %s186, %s187
      %p201 = scmp.eq.s32.totalorder %s27, 1
      %p202 = por %p200, %p201
      %p204 = scmp.ne.s32.totalorder %s187, %s203
      %p205 = scmp.eq.s32.totalorder %s27, 0
      %p206 = por %p204, %p205
      %p207 = scmp.le.s32.totalorder 1, %s21
      %p208 = scmp.lt.s32.totalorder %s21, 3
      %p209 = pnand %p207, %p208
      %p210 = pneg %p209
      // Predicated region
      $region9: #{tpu_custom_call.1} parent=5 // pred_check
        _
      $region10: #{tpu_custom_call.1} parent=5 // pred_check_branch
        %212 = sbr.rel (%p209) target = $region12
      $region11: #{tpu_custom_call.1} parent=5 // pred_region
        %s213 = ssub.s32 %s21, 1
        // Predicated region
        $region13: #{tpu_custom_call.1} parent=11 // pred_check
          %p214 = pneg %p68
        $region14: #{tpu_custom_call.1} parent=11 // pred_check_branch
          %216 = sbr.rel (%p214) target = $region16
        $region15: #{tpu_custom_call.1} parent=11 // pred_region
          %s218 = ssub.s32 1024, 1024
          %219 = vsyncadd [#allocation6], %s218
          %s220 = sshll.u32 [#allocation5], 4
          %s221 = int_to_ptr.vmem [resolvable:$true] %s220
          %226 = dma.hbm_to_vmem [thread:$0]  %s1, 1024, %s221, [#allocation6], 64, 64, 4
        $region16: #{tpu_custom_call.1} parent=11 // pred_fallthru
          _
        // Predicated region
        $region17: #{tpu_custom_call.1} parent=11 // pred_check
          %p227 = pneg %p89
        $region18: #{tpu_custom_call.1} parent=11 // pred_check_branch
          %229 = sbr.rel (%p227) target = $region20
        $region19: #{tpu_custom_call.1} parent=11 // pred_region
          _
        $region20: #{tpu_custom_call.1} parent=11 // pred_fallthru
          _
        // Predicated region
        $region21: #{tpu_custom_call.1} parent=11 // pred_check
          %p230 = pneg %p110
        $region22: #{tpu_custom_call.1} parent=11 // pred_check_branch
          %232 = sbr.rel (%p230) target = $region24
        $region23: #{tpu_custom_call.1} parent=11 // pred_region
          %s234 = ssub.s32 1024, 1024
          %235 = vsyncadd [#allocation6], %s234
          %s236 = sshll.u32 [#allocation7], 4
          %s237 = int_to_ptr.vmem [resolvable:$true] %s236
          %242 = dma.hbm_to_vmem [thread:$0]  %s3, 1024, %s237, [#allocation6], 64, 64, 4
        $region24: #{tpu_custom_call.1} parent=11 // pred_fallthru
          _
        // Predicated region
        $region25: #{tpu_custom_call.1} parent=11 // pred_check
          %p243 = pneg %p131
        $region26: #{tpu_custom_call.1} parent=11 // pred_check_branch
          %245 = sbr.rel (%p243) target = $region28
        $region27: #{tpu_custom_call.1} parent=11 // pred_region
          _
        $region28: #{tpu_custom_call.1} parent=11 // pred_fallthru
          _
        // Predicated region
        $region29: #{tpu_custom_call.1} parent=11 // pred_check
          %p246 = pneg %p152
        $region30: #{tpu_custom_call.1} parent=11 // pred_check_branch
          %248 = sbr.rel (%p246) target = $region32
        $region31: #{tpu_custom_call.1} parent=11 // pred_region
          %s250 = ssub.s32 1024, 1024
          %251 = vsyncadd [#allocation9], %s250
          %s252 = sshll.u32 [#allocation8], 4
          %s253 = int_to_ptr.vmem [resolvable:$true] %s252
          %258 = dma.hbm_to_vmem [thread:$0]  %s5, 1024, %s253, [#allocation9], 64, 64, 4
        $region32: #{tpu_custom_call.1} parent=11 // pred_fallthru
          _
        // Predicated region
        $region33: #{tpu_custom_call.1} parent=11 // pred_check
          %p259 = pneg %p173
        $region34: #{tpu_custom_call.1} parent=11 // pred_check_branch
          %261 = sbr.rel (%p259) target = $region36
        $region35: #{tpu_custom_call.1} parent=11 // pred_region
          _
        $region36: #{tpu_custom_call.1} parent=11 // pred_fallthru
          _
      $region12: #{tpu_custom_call.1} parent=5 // pred_fallthru
        _
      %p262 = scmp.lt.s32.totalorder %s21, 2
      // Predicated region
      $region37: #{tpu_custom_call.1} parent=5 // pred_check
        %p263 = pneg %p262
      $region38: #{tpu_custom_call.1} parent=5 // pred_check_branch
        %265 = sbr.rel (%p263) target = $region40
      $region39: #{tpu_custom_call.1} parent=5 // pred_region
        // Predicated region
        $region41: #{tpu_custom_call.1} parent=39 // pred_check
          %p266 = pneg %p41
        $region42: #{tpu_custom_call.1} parent=39 // pred_check_branch
          %268 = sbr.rel (%p266) target = $region44
        $region43: #{tpu_custom_call.1} parent=39 // pred_region
          %s269 = sand.u32 %s31, 1
          %s270 = scalar_lea.sflag [#allocation3], %s269
          %s271 = sand.u32 %s31, 1
          %s272 = smul.addr %s271, 128
          %s273 = scalar_lea.vmem [#allocation2], %s272
          %s274 = smul.u32 32, %s21
          %s276 = ssub.s32 2048, 2048
          %277 = vsyncadd %s270, %s276
          %s278 = smul.addr %s274, 64
          %s279 = scalar_lea.hbm %s0, %s278
          %s280 = sshll.u32 %s273, 4
          %s281 = int_to_ptr.vmem [resolvable:$true] %s280
          %286 = dma.hbm_to_vmem [thread:$0]  %s279, 2048, %s281, %s270, 64, 64, 4
        $region44: #{tpu_custom_call.1} parent=39 // pred_fallthru
          _
      $region40: #{tpu_custom_call.1} parent=5 // pred_fallthru
        _
      %p287 = scmp.le.s32.totalorder 1, %s21
      %p288 = scmp.lt.s32.totalorder %s21, 3
      %p289 = pnand %p287, %p288
      %p290 = pneg %p289
      // Predicated region
      $region45: #{tpu_custom_call.1} parent=5 // pred_check
        _
      $region46: #{tpu_custom_call.1} parent=5 // pred_check_branch
        %292 = sbr.rel (%p289) target = $region48
      $region47: #{tpu_custom_call.1} parent=5 // pred_region
        %s293 = ssub.s32 %s21, 1
        %s294 = sand.u32 %s34, 1
        %s295 = scalar_lea.sflag [#allocation3], %s294
        %s296 = sand.u32 %s34, 1
        %s297 = smul.addr %s296, 128
        %s298 = scalar_lea.vmem [#allocation2], %s297
        // Predicated region
        $region49: #{tpu_custom_call.1} parent=47 // pred_check
          %p299 = pneg %p47
        $region50: #{tpu_custom_call.1} parent=47 // pred_check_branch
          %301 = sbr.rel (%p299) target = $region52
        $region51: #{tpu_custom_call.1} parent=47 // pred_region
          %302 = dma.done %s295, 2048
        $region52: #{tpu_custom_call.1} parent=47 // pred_fallthru
          _
        // Predicated region
        $region53: #{tpu_custom_call.1} parent=47 // pred_check
          %p303 = pneg %p68
        $region54: #{tpu_custom_call.1} parent=47 // pred_check_branch
          %305 = sbr.rel (%p303) target = $region56
        $region55: #{tpu_custom_call.1} parent=47 // pred_region
          %306 = dma.done [#allocation6], 1024
        $region56: #{tpu_custom_call.1} parent=47 // pred_fallthru
          _
        // Predicated region
        $region57: #{tpu_custom_call.1} parent=47 // pred_check
          %p307 = pneg %p110
        $region58: #{tpu_custom_call.1} parent=47 // pred_check_branch
          %309 = sbr.rel (%p307) target = $region60
        $region59: #{tpu_custom_call.1} parent=47 // pred_region
          %310 = dma.done [#allocation6], 1024
        $region60: #{tpu_custom_call.1} parent=47 // pred_fallthru
          _
        // Predicated region
        $region61: #{tpu_custom_call.1} parent=47 // pred_check
          %p311 = pneg %p152
        $region62: #{tpu_custom_call.1} parent=47 // pred_check_branch
          %313 = sbr.rel (%p311) target = $region64
        $region63: #{tpu_custom_call.1} parent=47 // pred_region
          %314 = dma.done [#allocation9], 1024
        $region64: #{tpu_custom_call.1} parent=47 // pred_fallthru
          _
        %s315 = sand.u32 %s34, 1
        %s316 = scalar_lea.sflag [#allocation3], %s315
        %s317 = sand.u32 %s34, 1
        %s318 = smul.addr %s317, 128
        %s319 = scalar_lea.vmem [#allocation2], %s318
        %p320 = pneg %p47
        %p321 = pneg %p44
        %p322 = pneg %p68
        %p323 = pneg %p65
        %p324 = pneg %p89
        %p325 = pneg %p86
        %p326 = pneg %p110
        %p327 = pneg %p107
        %p328 = pneg %p131
        %p329 = pneg %p128
        %p330 = pneg %p152
        %p331 = pneg %p149
        %p332 = pneg %p173
        %p333 = pneg %p170
        %p334 = pneg %p199
        %p335 = pneg %p196
        %s336 = sand.u32 %s186, 1
        %s337 = scalar_lea.sflag [#allocation4], %s336
        %s338 = sand.u32 %s186, 1
        %s339 = smul.addr %s338, 256
        %s340 = scalar_lea.vmem [#allocation10], %s339
        %s341 = smul.u32 32, %s26
        %s342 = smul.u32 32, %s26
        %v344 = vld [vmem:[%s298] sm:$0xf]
        %v345 = vld [vmem:[%s298 + $0x4] sm:$0xf]
        %v346 = vld [vmem:[%s298 + $0x8] sm:$0xf]
        %v347 = vld [vmem:[%s298 + $0xc] sm:$0xf]
        %v348 = vld [vmem:[%s298 + $0x10] sm:$0xf]
        %v349 = vld [vmem:[%s298 + $0x14] sm:$0xf]
        %v350 = vld [vmem:[%s298 + $0x18] sm:$0xf]
        %v351 = vld [vmem:[%s298 + $0x1c] sm:$0xf]
        %v352 = vld [vmem:[%s298 + $0x20] sm:$0xf]
        %v353 = vld [vmem:[%s298 + $0x24] sm:$0xf]
        %v354 = vld [vmem:[%s298 + $0x28] sm:$0xf]
        %v355 = vld [vmem:[%s298 + $0x2c] sm:$0xf]
        %v356 = vld [vmem:[%s298 + $0x30] sm:$0xf]
        %v357 = vld [vmem:[%s298 + $0x34] sm:$0xf]
        %v358 = vld [vmem:[%s298 + $0x38] sm:$0xf]
        %v359 = vld [vmem:[%s298 + $0x3c] sm:$0xf]
        %v360 = vld [vmem:[%s298 + $0x40] sm:$0xf]
        %v361 = vld [vmem:[%s298 + $0x44] sm:$0xf]
        %v362 = vld [vmem:[%s298 + $0x48] sm:$0xf]
        %v363 = vld [vmem:[%s298 + $0x4c] sm:$0xf]
        %v364 = vld [vmem:[%s298 + $0x50] sm:$0xf]
        %v365 = vld [vmem:[%s298 + $0x54] sm:$0xf]
        %v366 = vld [vmem:[%s298 + $0x58] sm:$0xf]
        %v367 = vld [vmem:[%s298 + $0x5c] sm:$0xf]
        %v368 = vld [vmem:[%s298 + $0x60] sm:$0xf]
        %v369 = vld [vmem:[%s298 + $0x64] sm:$0xf]
        %v370 = vld [vmem:[%s298 + $0x68] sm:$0xf]
        %v371 = vld [vmem:[%s298 + $0x6c] sm:$0xf]
        %v372 = vld [vmem:[%s298 + $0x70] sm:$0xf]
        %v373 = vld [vmem:[%s298 + $0x74] sm:$0xf]
        %v374 = vld [vmem:[%s298 + $0x78] sm:$0xf]
        %v375 = vld [vmem:[%s298 + $0x7c] sm:$0xf]
        %v376 = vld [vmem:[#allocation5] sm:$0xf]
        %v377 = vld [vmem:[#allocation5 + $0x4] sm:$0xf]
        %v378 = vld [vmem:[#allocation5 + $0x8] sm:$0xf]
        %v379 = vld [vmem:[#allocation5 + $0xc] sm:$0xf]
        %v380 = vld [vmem:[#allocation5 + $0x10] sm:$0xf]
        %v381 = vld [vmem:[#allocation5 + $0x14] sm:$0xf]
        %v382 = vld [vmem:[#allocation5 + $0x18] sm:$0xf]
        %v383 = vld [vmem:[#allocation5 + $0x1c] sm:$0xf]
        %v384 = vld [vmem:[#allocation5 + $0x20] sm:$0xf]
        %v385 = vld [vmem:[#allocation5 + $0x24] sm:$0xf]
        %v386 = vld [vmem:[#allocation5 + $0x28] sm:$0xf]
        %v387 = vld [vmem:[#allocation5 + $0x2c] sm:$0xf]
        %v388 = vld [vmem:[#allocation5 + $0x30] sm:$0xf]
        %v389 = vld [vmem:[#allocation5 + $0x34] sm:$0xf]
        %v390 = vld [vmem:[#allocation5 + $0x38] sm:$0xf]
        %v391 = vld [vmem:[#allocation5 + $0x3c] sm:$0xf]
        %v392 = vld [vmem:[%s2] sm:$0x1]
        %v394 = vlaneseq
        %v395 = vshrl.u32 %v394, 7
        %v396 = vsub.s32 0, %v395
        %v397 = vrot.slane %v392, %v396
        %v431 = vunpack.c.l.b16 %v344
        %v432 = vunpack.c.l.b16 %v345
        %v433 = vunpack.c.l.b16 %v346
        %v434 = vunpack.c.l.b16 %v347
        %v435 = vunpack.c.l.b16 %v348
        %v436 = vunpack.c.l.b16 %v349
        %v437 = vunpack.c.l.b16 %v350
        %v438 = vunpack.c.l.b16 %v351
        %v439 = vunpack.c.l.b16 %v352
        %v440 = vunpack.c.l.b16 %v353
        %v441 = vunpack.c.l.b16 %v354
        %v442 = vunpack.c.l.b16 %v355
        %v443 = vunpack.c.l.b16 %v356
        %v444 = vunpack.c.l.b16 %v357
        %v445 = vunpack.c.l.b16 %v358
        %v446 = vunpack.c.l.b16 %v359
        %v447 = vunpack.c.l.b16 %v360
        %v448 = vunpack.c.l.b16 %v361
        %v449 = vunpack.c.l.b16 %v362
        %v450 = vunpack.c.l.b16 %v363
        %v451 = vunpack.c.l.b16 %v364
        %v452 = vunpack.c.l.b16 %v365
        %v453 = vunpack.c.l.b16 %v366
        %v454 = vunpack.c.l.b16 %v367
        %v455 = vunpack.c.l.b16 %v368
        %v456 = vunpack.c.l.b16 %v369
        %v457 = vunpack.c.l.b16 %v370
        %v458 = vunpack.c.l.b16 %v371
        %v459 = vunpack.c.l.b16 %v372
        %v460 = vunpack.c.l.b16 %v373
        %v461 = vunpack.c.l.b16 %v374
        %v462 = vunpack.c.l.b16 %v375
        %v463 = vpack.c.b16 %v432, %v431
        %v464 = vpack.c.b16 %v434, %v433
        %v465 = vpack.c.b16 %v436, %v435
        %v466 = vpack.c.b16 %v438, %v437
        %v467 = vpack.c.b16 %v440, %v439
        %v468 = vpack.c.b16 %v442, %v441
        %v469 = vpack.c.b16 %v444, %v443
        %v470 = vpack.c.b16 %v446, %v445
        %v471 = vpack.c.b16 %v448, %v447
        %v472 = vpack.c.b16 %v450, %v449
        %v473 = vpack.c.b16 %v452, %v451
        %v474 = vpack.c.b16 %v454, %v453
        %v475 = vpack.c.b16 %v456, %v455
        %v476 = vpack.c.b16 %v458, %v457
        %v477 = vpack.c.b16 %v460, %v459
        %v478 = vpack.c.b16 %v462, %v461
        %v511 = vunpack.c.l.b16 %v376
        %v512 = vunpack.c.l.b16 %v377
        %v513 = vunpack.c.l.b16 %v378
        %v514 = vunpack.c.l.b16 %v379
        %v515 = vunpack.c.l.b16 %v380
        %v516 = vunpack.c.l.b16 %v381
        %v517 = vunpack.c.l.b16 %v382
        %v518 = vunpack.c.l.b16 %v383
        %v519 = vunpack.c.l.b16 %v384
        %v520 = vunpack.c.l.b16 %v385
        %v521 = vunpack.c.l.b16 %v386
        %v522 = vunpack.c.l.b16 %v387
        %v523 = vunpack.c.l.b16 %v388
        %v524 = vunpack.c.l.b16 %v389
        %v525 = vunpack.c.l.b16 %v390
        %v526 = vunpack.c.l.b16 %v391
        %v527 = vpack.c.b16 %v512, %v511
        %v528 = vpack.c.b16 %v514, %v513
        %v529 = vpack.c.b16 %v516, %v515
        %v530 = vpack.c.b16 %v518, %v517
        %v531 = vpack.c.b16 %v520, %v519
        %v532 = vpack.c.b16 %v522, %v521
        %v533 = vpack.c.b16 %v524, %v523
        %v534 = vpack.c.b16 %v526, %v525
        %543 = vmatprep.subr.bf16.mxu0 0
        %544 = vmatpush1.bf16.msra.mxu0 %v527
        %545 = vmatprep.subr.bf16.mxu0 0
        %546 = vmatpush1.bf16.msra.mxu0 %v528
        %547 = vmatprep.subr.bf16.mxu0 0
        %548 = vmatpush1.bf16.msra.mxu0 %v529
        %549 = vmatprep.subr.bf16.mxu0 0
        %550 = vmatpush1.bf16.msra.mxu0 %v530
        %551 = vmatprep.subr.bf16.mxu0 0
        %552 = vmatpush1.bf16.msra.mxu0 %v531
        %553 = vmatprep.subr.bf16.mxu0 0
        %554 = vmatpush1.bf16.msra.mxu0 %v532
        %555 = vmatprep.subr.bf16.mxu0 0
        %556 = vmatpush1.bf16.msra.mxu0 %v533
        %557 = vmatprep.subr.bf16.mxu0 0
        %558 = vmatpush1.bf16.msra.mxu0 %v534
        %559 = vmatprep.subr.bf16.mxu0 0
        %560 = vmatpush1.bf16.msra.mxu0 0
        %561 = vmatprep.subr.bf16.mxu0 0
        %562 = vmatpush1.bf16.msra.mxu0 0
        %563 = vmatprep.subr.bf16.mxu0 0
        %564 = vmatpush1.bf16.msra.mxu0 0
        %565 = vmatprep.subr.bf16.mxu0 0
        %566 = vmatpush1.bf16.msra.mxu0 0
        %567 = vmatprep.subr.bf16.mxu0 0
        %568 = vmatpush1.bf16.msra.mxu0 0
        %569 = vmatprep.subr.bf16.mxu0 0
        %570 = vmatpush1.bf16.msra.mxu0 0
        %571 = vmatprep.subr.bf16.mxu0 0
        %572 = vmatpush1.bf16.msra.mxu0 0
        %573 = vmatprep.subr.bf16.mxu0 0
        %574 = vmatpush1.bf16.msra.mxu0 0
        %575 = vmatprep.mubr.bf16.mxu0 0
        %576 = vmatmul.mubr.bf16.gmra.mrb[0].mxu0 %v463
        %v577 = vpop.f32.mrb[0].mxu0
        %v578 = vadd.f32 %v397, %v577
        %v579 = vpop.f32.mrb[0].mxu0
        %v580 = vpop.f32.mrb[0].mxu0
        %v581 = vadd.f32 %v397, %v580
        %v582 = vpop.f32.mrb[0].mxu0
        %583 = vmatprep.mubr.bf16.mxu0 0
        %584 = vmatmul.mubr.bf16.gmra.mrb[0].mxu0 %v464
        %v585 = vpop.f32.mrb[0].mxu0
        %v586 = vadd.f32 %v397, %v585
        %v587 = vpop.f32.mrb[0].mxu0
        %v588 = vpop.f32.mrb[0].mxu0
        %v589 = vadd.f32 %v397, %v588
        %v590 = vpop.f32.mrb[0].mxu0
        %591 = vmatprep.mubr.bf16.mxu0 0
        %592 = vmatmul.mubr.bf16.gmra.mrb[0].mxu0 %v465
        %v593 = vpop.f32.mrb[0].mxu0
        %v594 = vadd.f32 %v397, %v593
        %v595 = vpop.f32.mrb[0].mxu0
        %v596 = vpop.f32.mrb[0].mxu0
        %v597 = vadd.f32 %v397, %v596
        %v598 = vpop.f32.mrb[0].mxu0
        %599 = vmatprep.mubr.bf16.mxu0 0
        %600 = vmatmul.mubr.bf16.gmra.mrb[0].mxu0 %v466
        %v601 = vpop.f32.mrb[0].mxu0
        %v602 = vadd.f32 %v397, %v601
        %v603 = vpop.f32.mrb[0].mxu0
        %v604 = vpop.f32.mrb[0].mxu0
        %v605 = vadd.f32 %v397, %v604
        %v606 = vpop.f32.mrb[0].mxu0
        %607 = vmatprep.mubr.bf16.mxu0 0
        %608 = vmatmul.mubr.bf16.gmra.mrb[0].mxu0 %v467
        %v609 = vpop.f32.mrb[0].mxu0
        %v610 = vadd.f32 %v397, %v609
        %v611 = vpop.f32.mrb[0].mxu0
        %v612 = vpop.f32.mrb[0].mxu0
        %v613 = vadd.f32 %v397, %v612
        %v614 = vpop.f32.mrb[0].mxu0
        %615 = vmatprep.mubr.bf16.mxu0 0
        %616 = vmatmul.mubr.bf16.gmra.mrb[0].mxu0 %v468
        %v617 = vpop.f32.mrb[0].mxu0
        %v618 = vadd.f32 %v397, %v617
        %v619 = vpop.f32.mrb[0].mxu0
        %v620 = vpop.f32.mrb[0].mxu0
        %v621 = vadd.f32 %v397, %v620
        %v622 = vpop.f32.mrb[0].mxu0
        %623 = vmatprep.mubr.bf16.mxu0 0
        %624 = vmatmul.mubr.bf16.gmra.mrb[0].mxu0 %v469
        %v625 = vpop.f32.mrb[0].mxu0
        %v626 = vadd.f32 %v397, %v625
        %v627 = vpop.f32.mrb[0].mxu0
        %v628 = vpop.f32.mrb[0].mxu0
        %v629 = vadd.f32 %v397, %v628
        %v630 = vpop.f32.mrb[0].mxu0
        %631 = vmatprep.mubr.bf16.mxu0 0
        %632 = vmatmul.mubr.bf16.gmra.mrb[0].mxu0 %v470
        %v633 = vpop.f32.mrb[0].mxu0
        %v634 = vadd.f32 %v397, %v633
        %v635 = vpop.f32.mrb[0].mxu0
        %v636 = vpop.f32.mrb[0].mxu0
        %v637 = vadd.f32 %v397, %v636
        %v638 = vpop.f32.mrb[0].mxu0
        %639 = vmatprep.mubr.bf16.mxu0 0
        %640 = vmatmul.mubr.bf16.gmra.mrb[0].mxu0 %v471
        %v641 = vpop.f32.mrb[0].mxu0
        %v642 = vadd.f32 %v397, %v641
        %v643 = vpop.f32.mrb[0].mxu0
        %v644 = vpop.f32.mrb[0].mxu0
        %v645 = vadd.f32 %v397, %v644
        %v646 = vpop.f32.mrb[0].mxu0
        %647 = vmatprep.mubr.bf16.mxu0 0
        %648 = vmatmul.mubr.bf16.gmra.mrb[0].mxu0 %v472
        %v649 = vpop.f32.mrb[0].mxu0
        %v650 = vadd.f32 %v397, %v649
        %v651 = vpop.f32.mrb[0].mxu0
        %v652 = vpop.f32.mrb[0].mxu0
        %v653 = vadd.f32 %v397, %v652
        %v654 = vpop.f32.mrb[0].mxu0
        %655 = vmatprep.mubr.bf16.mxu0 0
        %656 = vmatmul.mubr.bf16.gmra.mrb[0].mxu0 %v473
        %v657 = vpop.f32.mrb[0].mxu0
        %v658 = vadd.f32 %v397, %v657
        %v659 = vpop.f32.mrb[0].mxu0
        %v660 = vpop.f32.mrb[0].mxu0
        %v661 = vadd.f32 %v397, %v660
        %v662 = vpop.f32.mrb[0].mxu0
        %663 = vmatprep.mubr.bf16.mxu0 0
        %664 = vmatmul.mubr.bf16.gmra.mrb[0].mxu0 %v474
        %v665 = vpop.f32.mrb[0].mxu0
        %v666 = vadd.f32 %v397, %v665
        %v667 = vpop.f32.mrb[0].mxu0
        %v668 = vpop.f32.mrb[0].mxu0
        %v669 = vadd.f32 %v397, %v668
        %v670 = vpop.f32.mrb[0].mxu0
        %671 = vmatprep.mubr.bf16.mxu0 0
        %672 = vmatmul.mubr.bf16.gmra.mrb[0].mxu0 %v475
        %v673 = vpop.f32.mrb[0].mxu0
        %v674 = vadd.f32 %v397, %v673
        %v675 = vpop.f32.mrb[0].mxu0
        %v676 = vpop.f32.mrb[0].mxu0
        %v677 = vadd.f32 %v397, %v676
        %v678 = vpop.f32.mrb[0].mxu0
        %679 = vmatprep.mubr.bf16.mxu0 0
        %680 = vmatmul.mubr.bf16.gmra.mrb[0].mxu0 %v476
        %v681 = vpop.f32.mrb[0].mxu0
        %v682 = vadd.f32 %v397, %v681
        %v683 = vpop.f32.mrb[0].mxu0
        %v684 = vpop.f32.mrb[0].mxu0
        %v685 = vadd.f32 %v397, %v684
        %v686 = vpop.f32.mrb[0].mxu0
        %687 = vmatprep.mubr.bf16.mxu0 0
        %688 = vmatmul.mubr.bf16.gmra.mrb[0].mxu0 %v477
        %v689 = vpop.f32.mrb[0].mxu0
        %v690 = vadd.f32 %v397, %v689
        %v691 = vpop.f32.mrb[0].mxu0
        %v692 = vpop.f32.mrb[0].mxu0
        %v693 = vadd.f32 %v397, %v692
        %v694 = vpop.f32.mrb[0].mxu0
        %695 = vmatprep.mubr.bf16.mxu0 0
        %696 = vmatmul.mubr.bf16.gmra.mrb[0].mxu0 %v478
        %v697 = vpop.f32.mrb[0].mxu0
        %v698 = vadd.f32 %v397, %v697
        %v699 = vpop.f32.mrb[0].mxu0
        %v700 = vpop.f32.mrb[0].mxu0
        %v701 = vadd.f32 %v397, %v700
        %v702 = vpop.f32.mrb[0].mxu0
        %703 = vdwg.mxu0
        %v704 = vmax.f32 %v578, 0.0
        %v705 = vmax.f32 %v581, 0.0
        %v706 = vmax.f32 %v586, 0.0
        %v707 = vmax.f32 %v589, 0.0
        %v708 = vmax.f32 %v594, 0.0
        %v709 = vmax.f32 %v597, 0.0
        %v710 = vmax.f32 %v602, 0.0
        %v711 = vmax.f32 %v605, 0.0
        %v712 = vmax.f32 %v610, 0.0
        %v713 = vmax.f32 %v613, 0.0
        %v714 = vmax.f32 %v618, 0.0
        %v715 = vmax.f32 %v621, 0.0
        %v716 = vmax.f32 %v626, 0.0
        %v717 = vmax.f32 %v629, 0.0
        %v718 = vmax.f32 %v634, 0.0
        %v719 = vmax.f32 %v637, 0.0
        %v720 = vmax.f32 %v642, 0.0
        %v721 = vmax.f32 %v645, 0.0
        %v722 = vmax.f32 %v650, 0.0
        %v723 = vmax.f32 %v653, 0.0
        %v724 = vmax.f32 %v658, 0.0
        %v725 = vmax.f32 %v661, 0.0
        %v726 = vmax.f32 %v666, 0.0
        %v727 = vmax.f32 %v669, 0.0
        %v728 = vmax.f32 %v674, 0.0
        %v729 = vmax.f32 %v677, 0.0
        %v730 = vmax.f32 %v682, 0.0
        %v731 = vmax.f32 %v685, 0.0
        %v732 = vmax.f32 %v690, 0.0
        %v733 = vmax.f32 %v693, 0.0
        %v734 = vmax.f32 %v698, 0.0
        %v735 = vmax.f32 %v701, 0.0
        %v736 = vpack.c.bf16 %v705, %v704
        %v737 = vpack.c.bf16 %v707, %v706
        %v738 = vpack.c.bf16 %v709, %v708
        %v739 = vpack.c.bf16 %v711, %v710
        %v740 = vpack.c.bf16 %v713, %v712
        %v741 = vpack.c.bf16 %v715, %v714
        %v742 = vpack.c.bf16 %v717, %v716
        %v743 = vpack.c.bf16 %v719, %v718
        %v744 = vpack.c.bf16 %v721, %v720
        %v745 = vpack.c.bf16 %v723, %v722
        %v746 = vpack.c.bf16 %v725, %v724
        %v747 = vpack.c.bf16 %v727, %v726
        %v748 = vpack.c.bf16 %v729, %v728
        %v749 = vpack.c.bf16 %v731, %v730
        %v750 = vpack.c.bf16 %v733, %v732
        %v751 = vpack.c.bf16 %v735, %v734
        %v752 = vld [vmem:[#allocation7] sm:$0xf]
        %v753 = vld [vmem:[#allocation7 + $0x4] sm:$0xf]
        %v754 = vld [vmem:[#allocation7 + $0x8] sm:$0xf]
        %v755 = vld [vmem:[#allocation7 + $0xc] sm:$0xf]
        %v756 = vld [vmem:[#allocation7 + $0x10] sm:$0xf]
        %v757 = vld [vmem:[#allocation7 + $0x14] sm:$0xf]
        %v758 = vld [vmem:[#allocation7 + $0x18] sm:$0xf]
        %v759 = vld [vmem:[#allocation7 + $0x1c] sm:$0xf]
        %v760 = vld [vmem:[#allocation7 + $0x20] sm:$0xf]
        %v761 = vld [vmem:[#allocation7 + $0x24] sm:$0xf]
        %v762 = vld [vmem:[#allocation7 + $0x28] sm:$0xf]
        %v763 = vld [vmem:[#allocation7 + $0x2c] sm:$0xf]
        %v764 = vld [vmem:[#allocation7 + $0x30] sm:$0xf]
        %v765 = vld [vmem:[#allocation7 + $0x34] sm:$0xf]
        %v766 = vld [vmem:[#allocation7 + $0x38] sm:$0xf]
        %v767 = vld [vmem:[#allocation7 + $0x3c] sm:$0xf]
        %v768 = vld [vmem:[%s4] sm:$0x1]
        %v770 = vlaneseq
        %v771 = vshrl.u32 %v770, 7
        %v772 = vsub.s32 0, %v771
        %v773 = vrot.slane %v768, %v772
        %v791 = vunpack.c.l.b16 %v752
        %v792 = vunpack.c.l.b16 %v753
        %v793 = vunpack.c.l.b16 %v754
        %v794 = vunpack.c.l.b16 %v755
        %v795 = vunpack.c.l.b16 %v756
        %v796 = vunpack.c.l.b16 %v757
        %v797 = vunpack.c.l.b16 %v758
        %v798 = vunpack.c.l.b16 %v759
        %v799 = vunpack.c.l.b16 %v760
        %v800 = vunpack.c.l.b16 %v761
        %v801 = vunpack.c.l.b16 %v762
        %v802 = vunpack.c.l.b16 %v763
        %v803 = vunpack.c.l.b16 %v764
        %v804 = vunpack.c.l.b16 %v765
        %v805 = vunpack.c.l.b16 %v766
        %v806 = vunpack.c.l.b16 %v767
        %v807 = vpack.c.b16 %v792, %v791
        %v808 = vpack.c.b16 %v794, %v793
        %v809 = vpack.c.b16 %v796, %v795
        %v810 = vpack.c.b16 %v798, %v797
        %v811 = vpack.c.b16 %v800, %v799
        %v812 = vpack.c.b16 %v802, %v801
        %v813 = vpack.c.b16 %v804, %v803
        %v814 = vpack.c.b16 %v806, %v805
        %823 = vmatprep.subr.bf16.mxu0 0
        %824 = vmatpush1.bf16.msra.mxu0 %v807
        %825 = vmatprep.subr.bf16.mxu0 0
        %826 = vmatpush1.bf16.msra.mxu0 %v808
        %827 = vmatprep.subr.bf16.mxu0 0
        %828 = vmatpush1.bf16.msra.mxu0 %v809
        %829 = vmatprep.subr.bf16.mxu0 0
        %830 = vmatpush1.bf16.msra.mxu0 %v810
        %831 = vmatprep.subr.bf16.mxu0 0
        %832 = vmatpush1.bf16.msra.mxu0 %v811
        %833 = vmatprep.subr.bf16.mxu0 0
        %834 = vmatpush1.bf16.msra.mxu0 %v812
        %835 = vmatprep.subr.bf16.mxu0 0
        %836 = vmatpush1.bf16.msra.mxu0 %v813
        %837 = vmatprep.subr.bf16.mxu0 0
        %838 = vmatpush1.bf16.msra.mxu0 %v814
        %839 = vmatprep.subr.bf16.mxu0 0
        %840 = vmatpush1.bf16.msra.mxu0 0
        %841 = vmatprep.subr.bf16.mxu0 0
        %842 = vmatpush1.bf16.msra.mxu0 0
        %843 = vmatprep.subr.bf16.mxu0 0
        %844 = vmatpush1.bf16.msra.mxu0 0
        %845 = vmatprep.subr.bf16.mxu0 0
        %846 = vmatpush1.bf16.msra.mxu0 0
        %847 = vmatprep.subr.bf16.mxu0 0
        %848 = vmatpush1.bf16.msra.mxu0 0
        %849 = vmatprep.subr.bf16.mxu0 0
        %850 = vmatpush1.bf16.msra.mxu0 0
        %851 = vmatprep.subr.bf16.mxu0 0
        %852 = vmatpush1.bf16.msra.mxu0 0
        %853 = vmatprep.subr.bf16.mxu0 0
        %854 = vmatpush1.bf16.msra.mxu0 0
        %855 = vmatprep.mubr.bf16.mxu0 0
        %856 = vmatmul.mubr.bf16.gmra.mrb[0].mxu0 %v736
        %v857 = vpop.f32.mrb[0].mxu0
        %v858 = vadd.f32 %v773, %v857
        %v859 = vpop.f32.mrb[0].mxu0
        %v860 = vpop.f32.mrb[0].mxu0
        %v861 = vadd.f32 %v773, %v860
        %v862 = vpop.f32.mrb[0].mxu0
        %863 = vmatprep.mubr.bf16.mxu0 0
        %864 = vmatmul.mubr.bf16.gmra.mrb[0].mxu0 %v737
        %v865 = vpop.f32.mrb[0].mxu0
        %v866 = vadd.f32 %v773, %v865
        %v867 = vpop.f32.mrb[0].mxu0
        %v868 = vpop.f32.mrb[0].mxu0
        %v869 = vadd.f32 %v773, %v868
        %v870 = vpop.f32.mrb[0].mxu0
        %871 = vmatprep.mubr.bf16.mxu0 0
        %872 = vmatmul.mubr.bf16.gmra.mrb[0].mxu0 %v738
        %v873 = vpop.f32.mrb[0].mxu0
        %v874 = vadd.f32 %v773, %v873
        %v875 = vpop.f32.mrb[0].mxu0
        %v876 = vpop.f32.mrb[0].mxu0
        %v877 = vadd.f32 %v773, %v876
        %v878 = vpop.f32.mrb[0].mxu0
        %879 = vmatprep.mubr.bf16.mxu0 0
        %880 = vmatmul.mubr.bf16.gmra.mrb[0].mxu0 %v739
        %v881 = vpop.f32.mrb[0].mxu0
        %v882 = vadd.f32 %v773, %v881
        %v883 = vpop.f32.mrb[0].mxu0
        %v884 = vpop.f32.mrb[0].mxu0
        %v885 = vadd.f32 %v773, %v884
        %v886 = vpop.f32.mrb[0].mxu0
        %887 = vmatprep.mubr.bf16.mxu0 0
        %888 = vmatmul.mubr.bf16.gmra.mrb[0].mxu0 %v740
        %v889 = vpop.f32.mrb[0].mxu0
        %v890 = vadd.f32 %v773, %v889
        %v891 = vpop.f32.mrb[0].mxu0
        %v892 = vpop.f32.mrb[0].mxu0
        %v893 = vadd.f32 %v773, %v892
        %v894 = vpop.f32.mrb[0].mxu0
        %895 = vmatprep.mubr.bf16.mxu0 0
        %896 = vmatmul.mubr.bf16.gmra.mrb[0].mxu0 %v741
        %v897 = vpop.f32.mrb[0].mxu0
        %v898 = vadd.f32 %v773, %v897
        %v899 = vpop.f32.mrb[0].mxu0
        %v900 = vpop.f32.mrb[0].mxu0
        %v901 = vadd.f32 %v773, %v900
        %v902 = vpop.f32.mrb[0].mxu0
        %903 = vmatprep.mubr.bf16.mxu0 0
        %904 = vmatmul.mubr.bf16.gmra.mrb[0].mxu0 %v742
        %v905 = vpop.f32.mrb[0].mxu0
        %v906 = vadd.f32 %v773, %v905
        %v907 = vpop.f32.mrb[0].mxu0
        %v908 = vpop.f32.mrb[0].mxu0
        %v909 = vadd.f32 %v773, %v908
        %v910 = vpop.f32.mrb[0].mxu0
        %911 = vmatprep.mubr.bf16.mxu0 0
        %912 = vmatmul.mubr.bf16.gmra.mrb[0].mxu0 %v743
        %v913 = vpop.f32.mrb[0].mxu0
        %v914 = vadd.f32 %v773, %v913
        %v915 = vpop.f32.mrb[0].mxu0
        %v916 = vpop.f32.mrb[0].mxu0
        %v917 = vadd.f32 %v773, %v916
        %v918 = vpop.f32.mrb[0].mxu0
        %919 = vmatprep.mubr.bf16.mxu0 0
        %920 = vmatmul.mubr.bf16.gmra.mrb[0].mxu0 %v744
        %v921 = vpop.f32.mrb[0].mxu0
        %v922 = vadd.f32 %v773, %v921
        %v923 = vpop.f32.mrb[0].mxu0
        %v924 = vpop.f32.mrb[0].mxu0
        %v925 = vadd.f32 %v773, %v924
        %v926 = vpop.f32.mrb[0].mxu0
        %927 = vmatprep.mubr.bf16.mxu0 0
        %928 = vmatmul.mubr.bf16.gmra.mrb[0].mxu0 %v745
        %v929 = vpop.f32.mrb[0].mxu0
        %v930 = vadd.f32 %v773, %v929
        %v931 = vpop.f32.mrb[0].mxu0
        %v932 = vpop.f32.mrb[0].mxu0
        %v933 = vadd.f32 %v773, %v932
        %v934 = vpop.f32.mrb[0].mxu0
        %935 = vmatprep.mubr.bf16.mxu0 0
        %936 = vmatmul.mubr.bf16.gmra.mrb[0].mxu0 %v746
        %v937 = vpop.f32.mrb[0].mxu0
        %v938 = vadd.f32 %v773, %v937
        %v939 = vpop.f32.mrb[0].mxu0
        %v940 = vpop.f32.mrb[0].mxu0
        %v941 = vadd.f32 %v773, %v940
        %v942 = vpop.f32.mrb[0].mxu0
        %943 = vmatprep.mubr.bf16.mxu0 0
        %944 = vmatmul.mubr.bf16.gmra.mrb[0].mxu0 %v747
        %v945 = vpop.f32.mrb[0].mxu0
        %v946 = vadd.f32 %v773, %v945
        %v947 = vpop.f32.mrb[0].mxu0
        %v948 = vpop.f32.mrb[0].mxu0
        %v949 = vadd.f32 %v773, %v948
        %v950 = vpop.f32.mrb[0].mxu0
        %951 = vmatprep.mubr.bf16.mxu0 0
        %952 = vmatmul.mubr.bf16.gmra.mrb[0].mxu0 %v748
        %v953 = vpop.f32.mrb[0].mxu0
        %v954 = vadd.f32 %v773, %v953
        %v955 = vpop.f32.mrb[0].mxu0
        %v956 = vpop.f32.mrb[0].mxu0
        %v957 = vadd.f32 %v773, %v956
        %v958 = vpop.f32.mrb[0].mxu0
        %959 = vmatprep.mubr.bf16.mxu0 0
        %960 = vmatmul.mubr.bf16.gmra.mrb[0].mxu0 %v749
        %v961 = vpop.f32.mrb[0].mxu0
        %v962 = vadd.f32 %v773, %v961
        %v963 = vpop.f32.mrb[0].mxu0
        %v964 = vpop.f32.mrb[0].mxu0
        %v965 = vadd.f32 %v773, %v964
        %v966 = vpop.f32.mrb[0].mxu0
        %967 = vmatprep.mubr.bf16.mxu0 0
        %968 = vmatmul.mubr.bf16.gmra.mrb[0].mxu0 %v750
        %v969 = vpop.f32.mrb[0].mxu0
        %v970 = vadd.f32 %v773, %v969
        %v971 = vpop.f32.mrb[0].mxu0
        %v972 = vpop.f32.mrb[0].mxu0
        %v973 = vadd.f32 %v773, %v972
        %v974 = vpop.f32.mrb[0].mxu0
        %975 = vmatprep.mubr.bf16.mxu0 0
        %976 = vmatmul.mubr.bf16.gmra.mrb[0].mxu0 %v751
        %v977 = vpop.f32.mrb[0].mxu0
        %v978 = vadd.f32 %v773, %v977
        %v979 = vpop.f32.mrb[0].mxu0
        %v980 = vpop.f32.mrb[0].mxu0
        %v981 = vadd.f32 %v773, %v980
        %v982 = vpop.f32.mrb[0].mxu0
        %983 = vdwg.mxu0
        %v984 = vmax.f32 %v858, 0.0
        %v985 = vmax.f32 %v861, 0.0
        %v986 = vmax.f32 %v866, 0.0
        %v987 = vmax.f32 %v869, 0.0
        %v988 = vmax.f32 %v874, 0.0
        %v989 = vmax.f32 %v877, 0.0
        %v990 = vmax.f32 %v882, 0.0
        %v991 = vmax.f32 %v885, 0.0
        %v992 = vmax.f32 %v890, 0.0
        %v993 = vmax.f32 %v893, 0.0
        %v994 = vmax.f32 %v898, 0.0
        %v995 = vmax.f32 %v901, 0.0
        %v996 = vmax.f32 %v906, 0.0
        %v997 = vmax.f32 %v909, 0.0
        %v998 = vmax.f32 %v914, 0.0
        %v999 = vmax.f32 %v917, 0.0
        %v1000 = vmax.f32 %v922, 0.0
        %v1001 = vmax.f32 %v925, 0.0
        %v1002 = vmax.f32 %v930, 0.0
        %v1003 = vmax.f32 %v933, 0.0
        %v1004 = vmax.f32 %v938, 0.0
        %v1005 = vmax.f32 %v941, 0.0
        %v1006 = vmax.f32 %v946, 0.0
        %v1007 = vmax.f32 %v949, 0.0
        %v1008 = vmax.f32 %v954, 0.0
        %v1009 = vmax.f32 %v957, 0.0
        %v1010 = vmax.f32 %v962, 0.0
        %v1011 = vmax.f32 %v965, 0.0
        %v1012 = vmax.f32 %v970, 0.0
        %v1013 = vmax.f32 %v973, 0.0
        %v1014 = vmax.f32 %v978, 0.0
        %v1015 = vmax.f32 %v981, 0.0
        %v1016 = vpack.c.bf16 %v985, %v984
        %v1017 = vpack.c.bf16 %v987, %v986
        %v1018 = vpack.c.bf16 %v989, %v988
        %v1019 = vpack.c.bf16 %v991, %v990
        %v1020 = vpack.c.bf16 %v993, %v992
        %v1021 = vpack.c.bf16 %v995, %v994
        %v1022 = vpack.c.bf16 %v997, %v996
        %v1023 = vpack.c.bf16 %v999, %v998
        %v1024 = vpack.c.bf16 %v1001, %v1000
        %v1025 = vpack.c.bf16 %v1003, %v1002
        %v1026 = vpack.c.bf16 %v1005, %v1004
        %v1027 = vpack.c.bf16 %v1007, %v1006
        %v1028 = vpack.c.bf16 %v1009, %v1008
        %v1029 = vpack.c.bf16 %v1011, %v1010
        %v1030 = vpack.c.bf16 %v1013, %v1012
        %v1031 = vpack.c.bf16 %v1015, %v1014
        %v1032 = vld [vmem:[#allocation8] sm:$0xf]
        %v1033 = vld [vmem:[#allocation8 + $0x4] sm:$0xf]
        %v1034 = vld [vmem:[#allocation8 + $0x8] sm:$0xf]
        %v1035 = vld [vmem:[#allocation8 + $0xc] sm:$0xf]
        %v1036 = vld [vmem:[#allocation8 + $0x10] sm:$0xf]
        %v1037 = vld [vmem:[#allocation8 + $0x14] sm:$0xf]
        %v1038 = vld [vmem:[#allocation8 + $0x18] sm:$0xf]
        %v1039 = vld [vmem:[#allocation8 + $0x1c] sm:$0xf]
        %v1040 = vld [vmem:[#allocation8 + $0x20] sm:$0xf]
        %v1041 = vld [vmem:[#allocation8 + $0x24] sm:$0xf]
        %v1042 = vld [vmem:[#allocation8 + $0x28] sm:$0xf]
        %v1043 = vld [vmem:[#allocation8 + $0x2c] sm:$0xf]
        %v1044 = vld [vmem:[#allocation8 + $0x30] sm:$0xf]
        %v1045 = vld [vmem:[#allocation8 + $0x34] sm:$0xf]
        %v1046 = vld [vmem:[#allocation8 + $0x38] sm:$0xf]
        %v1047 = vld [vmem:[#allocation8 + $0x3c] sm:$0xf]
        %v1048 = vld [vmem:[%s6] sm:$0x1]
        %v1050 = vlaneseq
        %v1051 = vshrl.u32 %v1050, 7
        %v1052 = vsub.s32 0, %v1051
        %v1053 = vrot.slane %v1048, %v1052
        %v1071 = vunpack.c.l.b16 %v1032
        %v1072 = vunpack.c.l.b16 %v1033
        %v1073 = vunpack.c.l.b16 %v1034
        %v1074 = vunpack.c.l.b16 %v1035
        %v1075 = vunpack.c.l.b16 %v1036
        %v1076 = vunpack.c.l.b16 %v1037
        %v1077 = vunpack.c.l.b16 %v1038
        %v1078 = vunpack.c.l.b16 %v1039
        %v1079 = vunpack.c.l.b16 %v1040
        %v1080 = vunpack.c.l.b16 %v1041
        %v1081 = vunpack.c.l.b16 %v1042
        %v1082 = vunpack.c.l.b16 %v1043
        %v1083 = vunpack.c.l.b16 %v1044
        %v1084 = vunpack.c.l.b16 %v1045
        %v1085 = vunpack.c.l.b16 %v1046
        %v1086 = vunpack.c.l.b16 %v1047
        %v1087 = vpack.c.b16 %v1072, %v1071
        %v1088 = vpack.c.b16 %v1074, %v1073
        %v1089 = vpack.c.b16 %v1076, %v1075
        %v1090 = vpack.c.b16 %v1078, %v1077
        %v1091 = vpack.c.b16 %v1080, %v1079
        %v1092 = vpack.c.b16 %v1082, %v1081
        %v1093 = vpack.c.b16 %v1084, %v1083
        %v1094 = vpack.c.b16 %v1086, %v1085
        %1103 = vmatprep.subr.bf16.mxu0 0
        %1104 = vmatpush1.bf16.msra.mxu0 %v1087
        %1105 = vmatprep.subr.bf16.mxu0 0
        %1106 = vmatpush1.bf16.msra.mxu0 %v1088
        %1107 = vmatprep.subr.bf16.mxu0 0
        %1108 = vmatpush1.bf16.msra.mxu0 %v1089
        %1109 = vmatprep.subr.bf16.mxu0 0
        %1110 = vmatpush1.bf16.msra.mxu0 %v1090
        %1111 = vmatprep.subr.bf16.mxu0 0
        %1112 = vmatpush1.bf16.msra.mxu0 %v1091
        %1113 = vmatprep.subr.bf16.mxu0 0
        %1114 = vmatpush1.bf16.msra.mxu0 %v1092
        %1115 = vmatprep.subr.bf16.mxu0 0
        %1116 = vmatpush1.bf16.msra.mxu0 %v1093
        %1117 = vmatprep.subr.bf16.mxu0 0
        %1118 = vmatpush1.bf16.msra.mxu0 %v1094
        %1119 = vmatprep.subr.bf16.mxu0 0
        %1120 = vmatpush1.bf16.msra.mxu0 0
        %1121 = vmatprep.subr.bf16.mxu0 0
        %1122 = vmatpush1.bf16.msra.mxu0 0
        %1123 = vmatprep.subr.bf16.mxu0 0
        %1124 = vmatpush1.bf16.msra.mxu0 0
        %1125 = vmatprep.subr.bf16.mxu0 0
        %1126 = vmatpush1.bf16.msra.mxu0 0
        %1127 = vmatprep.subr.bf16.mxu0 0
        %1128 = vmatpush1.bf16.msra.mxu0 0
        %1129 = vmatprep.subr.bf16.mxu0 0
        %1130 = vmatpush1.bf16.msra.mxu0 0
        %1131 = vmatprep.subr.bf16.mxu0 0
        %1132 = vmatpush1.bf16.msra.mxu0 0
        %1133 = vmatprep.subr.bf16.mxu0 0
        %1134 = vmatpush1.bf16.msra.mxu0 0
        %1135 = vmatprep.mubr.bf16.mxu0 0
        %1136 = vmatmul.mubr.bf16.gmra.mrb[0].mxu0 %v1016
        %v1137 = vpop.f32.mrb[0].mxu0
        %v1138 = vadd.f32 %v1053, %v1137
        %v1139 = vpop.f32.mrb[0].mxu0
        %v1140 = vpop.f32.mrb[0].mxu0
        %v1141 = vadd.f32 %v1053, %v1140
        %v1142 = vpop.f32.mrb[0].mxu0
        %1143 = vmatprep.mubr.bf16.mxu0 0
        %1144 = vmatmul.mubr.bf16.gmra.mrb[0].mxu0 %v1017
        %v1145 = vpop.f32.mrb[0].mxu0
        %v1146 = vadd.f32 %v1053, %v1145
        %v1147 = vpop.f32.mrb[0].mxu0
        %v1148 = vpop.f32.mrb[0].mxu0
        %v1149 = vadd.f32 %v1053, %v1148
        %v1150 = vpop.f32.mrb[0].mxu0
        %1151 = vmatprep.mubr.bf16.mxu0 0
        %1152 = vmatmul.mubr.bf16.gmra.mrb[0].mxu0 %v1018
        %v1153 = vpop.f32.mrb[0].mxu0
        %v1154 = vadd.f32 %v1053, %v1153
        %v1155 = vpop.f32.mrb[0].mxu0
        %v1156 = vpop.f32.mrb[0].mxu0
        %v1157 = vadd.f32 %v1053, %v1156
        %v1158 = vpop.f32.mrb[0].mxu0
        %1159 = vmatprep.mubr.bf16.mxu0 0
        %1160 = vmatmul.mubr.bf16.gmra.mrb[0].mxu0 %v1019
        %v1161 = vpop.f32.mrb[0].mxu0
        %v1162 = vadd.f32 %v1053, %v1161
        %v1163 = vpop.f32.mrb[0].mxu0
        %v1164 = vpop.f32.mrb[0].mxu0
        %v1165 = vadd.f32 %v1053, %v1164
        %v1166 = vpop.f32.mrb[0].mxu0
        %1167 = vmatprep.mubr.bf16.mxu0 0
        %1168 = vmatmul.mubr.bf16.gmra.mrb[0].mxu0 %v1020
        %v1169 = vpop.f32.mrb[0].mxu0
        %v1170 = vadd.f32 %v1053, %v1169
        %v1171 = vpop.f32.mrb[0].mxu0
        %v1172 = vpop.f32.mrb[0].mxu0
        %v1173 = vadd.f32 %v1053, %v1172
        %v1174 = vpop.f32.mrb[0].mxu0
        %1175 = vmatprep.mubr.bf16.mxu0 0
        %1176 = vmatmul.mubr.bf16.gmra.mrb[0].mxu0 %v1021
        %v1177 = vpop.f32.mrb[0].mxu0
        %v1178 = vadd.f32 %v1053, %v1177
        %v1179 = vpop.f32.mrb[0].mxu0
        %v1180 = vpop.f32.mrb[0].mxu0
        %v1181 = vadd.f32 %v1053, %v1180
        %v1182 = vpop.f32.mrb[0].mxu0
        %1183 = vmatprep.mubr.bf16.mxu0 0
        %1184 = vmatmul.mubr.bf16.gmra.mrb[0].mxu0 %v1022
        %v1185 = vpop.f32.mrb[0].mxu0
        %v1186 = vadd.f32 %v1053, %v1185
        %v1187 = vpop.f32.mrb[0].mxu0
        %v1188 = vpop.f32.mrb[0].mxu0
        %v1189 = vadd.f32 %v1053, %v1188
        %v1190 = vpop.f32.mrb[0].mxu0
        %1191 = vmatprep.mubr.bf16.mxu0 0
        %1192 = vmatmul.mubr.bf16.gmra.mrb[0].mxu0 %v1023
        %v1193 = vpop.f32.mrb[0].mxu0
        %v1194 = vadd.f32 %v1053, %v1193
        %v1195 = vpop.f32.mrb[0].mxu0
        %v1196 = vpop.f32.mrb[0].mxu0
        %v1197 = vadd.f32 %v1053, %v1196
        %v1198 = vpop.f32.mrb[0].mxu0
        %1199 = vmatprep.mubr.bf16.mxu0 0
        %1200 = vmatmul.mubr.bf16.gmra.mrb[0].mxu0 %v1024
        %v1201 = vpop.f32.mrb[0].mxu0
        %v1202 = vadd.f32 %v1053, %v1201
        %v1203 = vpop.f32.mrb[0].mxu0
        %v1204 = vpop.f32.mrb[0].mxu0
        %v1205 = vadd.f32 %v1053, %v1204
        %v1206 = vpop.f32.mrb[0].mxu0
        %1207 = vmatprep.mubr.bf16.mxu0 0
        %1208 = vmatmul.mubr.bf16.gmra.mrb[0].mxu0 %v1025
        %v1209 = vpop.f32.mrb[0].mxu0
        %v1210 = vadd.f32 %v1053, %v1209
        %v1211 = vpop.f32.mrb[0].mxu0
        %v1212 = vpop.f32.mrb[0].mxu0
        %v1213 = vadd.f32 %v1053, %v1212
        %v1214 = vpop.f32.mrb[0].mxu0
        %1215 = vmatprep.mubr.bf16.mxu0 0
        %1216 = vmatmul.mubr.bf16.gmra.mrb[0].mxu0 %v1026
        %v1217 = vpop.f32.mrb[0].mxu0
        %v1218 = vadd.f32 %v1053, %v1217
        %v1219 = vpop.f32.mrb[0].mxu0
        %v1220 = vpop.f32.mrb[0].mxu0
        %v1221 = vadd.f32 %v1053, %v1220
        %v1222 = vpop.f32.mrb[0].mxu0
        %1223 = vmatprep.mubr.bf16.mxu0 0
        %1224 = vmatmul.mubr.bf16.gmra.mrb[0].mxu0 %v1027
        %v1225 = vpop.f32.mrb[0].mxu0
        %v1226 = vadd.f32 %v1053, %v1225
        %v1227 = vpop.f32.mrb[0].mxu0
        %v1228 = vpop.f32.mrb[0].mxu0
        %v1229 = vadd.f32 %v1053, %v1228
        %v1230 = vpop.f32.mrb[0].mxu0
        %1231 = vmatprep.mubr.bf16.mxu0 0
        %1232 = vmatmul.mubr.bf16.gmra.mrb[0].mxu0 %v1028
        %v1233 = vpop.f32.mrb[0].mxu0
        %v1234 = vadd.f32 %v1053, %v1233
        %v1235 = vpop.f32.mrb[0].mxu0
        %v1236 = vpop.f32.mrb[0].mxu0
        %v1237 = vadd.f32 %v1053, %v1236
        %v1238 = vpop.f32.mrb[0].mxu0
        %1239 = vmatprep.mubr.bf16.mxu0 0
        %1240 = vmatmul.mubr.bf16.gmra.mrb[0].mxu0 %v1029
        %v1241 = vpop.f32.mrb[0].mxu0
        %v1242 = vadd.f32 %v1053, %v1241
        %v1243 = vpop.f32.mrb[0].mxu0
        %v1244 = vpop.f32.mrb[0].mxu0
        %v1245 = vadd.f32 %v1053, %v1244
        %v1246 = vpop.f32.mrb[0].mxu0
        %1247 = vmatprep.mubr.bf16.mxu0 0
        %1248 = vmatmul.mubr.bf16.gmra.mrb[0].mxu0 %v1030
        %v1249 = vpop.f32.mrb[0].mxu0
        %v1250 = vadd.f32 %v1053, %v1249
        %v1251 = vpop.f32.mrb[0].mxu0
        %v1252 = vpop.f32.mrb[0].mxu0
        %v1253 = vadd.f32 %v1053, %v1252
        %v1254 = vpop.f32.mrb[0].mxu0
        %1255 = vmatprep.mubr.bf16.mxu0 0
        %1256 = vmatmul.mubr.bf16.gmra.mrb[0].mxu0 %v1031
        %v1257 = vpop.f32.mrb[0].mxu0
        %v1258 = vadd.f32 %v1053, %v1257
        %v1259 = vpop.f32.mrb[0].mxu0
        %v1260 = vpop.f32.mrb[0].mxu0
        %v1261 = vadd.f32 %v1053, %v1260
        %v1262 = vpop.f32.mrb[0].mxu0
        %1263 = vdwg.mxu0
        %1264 = vst [vmem:[%s340] sm:$0xff] %v1138
        %1265 = vst [vmem:[%s340 + $0x8] sm:$0xff] %v1141
        %1266 = vst [vmem:[%s340 + $0x10] sm:$0xff] %v1146
        %1267 = vst [vmem:[%s340 + $0x18] sm:$0xff] %v1149
        %1268 = vst [vmem:[%s340 + $0x20] sm:$0xff] %v1154
        %1269 = vst [vmem:[%s340 + $0x28] sm:$0xff] %v1157
        %1270 = vst [vmem:[%s340 + $0x30] sm:$0xff] %v1162
        %1271 = vst [vmem:[%s340 + $0x38] sm:$0xff] %v1165
        %1272 = vst [vmem:[%s340 + $0x40] sm:$0xff] %v1170
        %1273 = vst [vmem:[%s340 + $0x48] sm:$0xff] %v1173
        %1274 = vst [vmem:[%s340 + $0x50] sm:$0xff] %v1178
        %1275 = vst [vmem:[%s340 + $0x58] sm:$0xff] %v1181
        %1276 = vst [vmem:[%s340 + $0x60] sm:$0xff] %v1186
        %1277 = vst [vmem:[%s340 + $0x68] sm:$0xff] %v1189
        %1278 = vst [vmem:[%s340 + $0x70] sm:$0xff] %v1194
        %1279 = vst [vmem:[%s340 + $0x78] sm:$0xff] %v1197
        %1280 = vst [vmem:[%s340 + $0x80] sm:$0xff] %v1202
        %1281 = vst [vmem:[%s340 + $0x88] sm:$0xff] %v1205
        %1282 = vst [vmem:[%s340 + $0x90] sm:$0xff] %v1210
        %1283 = vst [vmem:[%s340 + $0x98] sm:$0xff] %v1213
        %1284 = vst [vmem:[%s340 + $0xa0] sm:$0xff] %v1218
        %1285 = vst [vmem:[%s340 + $0xa8] sm:$0xff] %v1221
        %1286 = vst [vmem:[%s340 + $0xb0] sm:$0xff] %v1226
        %1287 = vst [vmem:[%s340 + $0xb8] sm:$0xff] %v1229
        %1288 = vst [vmem:[%s340 + $0xc0] sm:$0xff] %v1234
        %1289 = vst [vmem:[%s340 + $0xc8] sm:$0xff] %v1237
        %1290 = vst [vmem:[%s340 + $0xd0] sm:$0xff] %v1242
        %1291 = vst [vmem:[%s340 + $0xd8] sm:$0xff] %v1245
        %1292 = vst [vmem:[%s340 + $0xe0] sm:$0xff] %v1250
        %1293 = vst [vmem:[%s340 + $0xe8] sm:$0xff] %v1253
        %1294 = vst [vmem:[%s340 + $0xf0] sm:$0xff] %v1258
        %1295 = vst [vmem:[%s340 + $0xf8] sm:$0xff] %v1261
        %s1296 = sand.u32 %s186, 1
        %s1297 = scalar_lea.sflag [#allocation4], %s1296
        %s1298 = sand.u32 %s186, 1
        %s1299 = smul.addr %s1298, 256
        %s1300 = scalar_lea.vmem [#allocation10], %s1299
        // Predicated region
        $region65: #{tpu_custom_call.1} parent=47 // pred_check
          %p1301 = pneg %p196
        $region66: #{tpu_custom_call.1} parent=47 // pred_check_branch
          %1303 = sbr.rel (%p1301) target = $region68
        $region67: #{tpu_custom_call.1} parent=47 // pred_region
          %s1304 = smul.u32 32, %s26
          %s1306 = ssub.s32 4096, 4096
          %1307 = vsyncadd %s1297, %s1306
          %s1308 = smul.addr %s1304, 128
          %s1309 = scalar_lea.hbm %s7, %s1308
          %s1310 = sshll.u32 %s1300, 4
          %s1311 = int_to_ptr.vmem [resolvable:$true] %s1310
          %1316 = dma.vmem_to_hbm [thread:$0]  %s1311, 4096, %s1309, %s1297, 128, 128, 8
        $region68: #{tpu_custom_call.1} parent=47 // pred_fallthru
          _
      $region48: #{tpu_custom_call.1} parent=5 // pred_fallthru
        _
      %p1317 = scmp.le.s32.totalorder 2, %s21
      // Predicated region
      $region69: #{tpu_custom_call.1} parent=5 // pred_check
        %p1318 = pneg %p1317
      $region70: #{tpu_custom_call.1} parent=5 // pred_check_branch
        %1320 = sbr.rel (%p1318) target = $region72
      $region71: #{tpu_custom_call.1} parent=5 // pred_region
        %s1321 = ssub.s32 %s21, 2
        // Predicated region
        $region73: #{tpu_custom_call.1} parent=71 // pred_check
          %p1322 = pneg %p202
        $region74: #{tpu_custom_call.1} parent=71 // pred_check_branch
          %1324 = sbr.rel (%p1322) target = $region76
        $region75: #{tpu_custom_call.1} parent=71 // pred_region
          %s1325 = sand.u32 %s187, 1
          %s1326 = scalar_lea.sflag [#allocation4], %s1325
          %s1327 = sand.u32 %s187, 1
          %s1328 = smul.addr %s1327, 256
          %s1329 = scalar_lea.vmem [#allocation10], %s1328
          %1330 = dma.done %s1326, 4096
        $region76: #{tpu_custom_call.1} parent=71 // pred_fallthru
          _
      $region72: #{tpu_custom_call.1} parent=5 // pred_fallthru
        _
    $region6: #{tpu_custom_call.1} parent=1 // loop_footer
      %s25 = sadd.s32 1, %s21
    $region7: #{tpu_custom_call.1} parent=1 // loop_footer_branch
      %20 = sbr.rel target = $region3
    $region8: #{tpu_custom_call.1} parent=1 // loop_exit
      _
    %1331 = vsyncpa [#allocation3], 1
    %s1332 = scalar_lea.sflag [#allocation3], 1
    %1333 = vsyncpa %s1332, 1
    %1334 = vsyncpa [#allocation6], 1
    %1335 = vsyncpa [#allocation9], 1
    %1336 = vsyncpa [#allocation4], 1
    %s1337 = scalar_lea.sflag [#allocation4], 1
    %1338 = vsyncpa %s1337, 1

</llo_original>
